<compile_context>
chip_gen: v7x
topology: tpu7x:2x2x1
jax: 0.10.0
libtpu: 0.0.40
codegen_flags: <defaults>
</compile_context>

<pallas_src>
import functools

import jax
import jax.numpy as jnp
from jax.experimental import pallas as pl
from jax.experimental.pallas import tpu as pltpu

FC = 50              # fully_connected_size from the module
LEAKY_SLOPE = 0.01   # torch.nn.LeakyReLU default negative_slope


def _leaky_relu(x):
    return jnp.where(x > 0, x, LEAKY_SLOPE * x)


def _round_up(x, m):
    return (x + m - 1) // m * m


def position_encoder_kernel(x_ref,
                            w1_ref, w2_ref, w3_ref, w4_ref,
                            b_ref,
                            o_ref,
                            *, use_bf16):
    # Only the MXU inputs are cast; accumulation and elementwise stay f32.
    if use_bf16:
        cast = lambda a: a.astype(jnp.bfloat16)
    else:
        cast = lambda a: a

    x = x_ref[...]                                   # (TM, position_size) f32

    h = jnp.dot(cast(x), cast(w1_ref[...]), preferred_element_type=jnp.float32)
    h = _leaky_relu(h + b_ref[0:1, :FC])

    h = jnp.dot(cast(h), cast(w2_ref[...]), preferred_element_type=jnp.float32)
    h = _leaky_relu(h + b_ref[1:2, :FC])

    h = jnp.dot(cast(h), cast(w3_ref[...]), preferred_element_type=jnp.float32)
    h = _leaky_relu(h + b_ref[2:3, :FC])

    out = jnp.dot(cast(h), cast(w4_ref[...]), preferred_element_type=jnp.float32)
    out = out + b_ref[3:4, :]                        # (TM, n_pad), lane-dense
    o_ref[...] = out.astype(o_ref.dtype)


def position_encoder_forward(position, params, *, block_m=512, use_bf16=False):
    """position: (B, position_size) f32.
    params: dict of (in, out) weights w1..w4 and (1, out) biases b1..b4."""
    assert block_m % 8 == 0, "block_m must be a multiple of 8"
    B, position_size = position.shape
    code_size = params["w4"].shape[1]

    # Lane-dense output slab: pad code_size up to a multiple of 128 with zero
    # weight columns; slice back after the call.
    n_pad = _round_up(code_size, 128)

    # Batch tile: as large as block_m allows (amortizes ~0.35 us/step), but no
    # larger than the (8-aligned) batch itself.  Pad the batch to a multiple of
    # the tile so the last tile never reads/writes out of the logical range.
    tm = min(block_m, _round_up(B, 8))
    b_pad = _round_up(B, tm)
    x = position
    if b_pad != B:
        x = jnp.pad(x, ((0, b_pad - B), (0, 0)))

    # Zero-pad the last-layer weight to the lane-dense output width.
    w4 = params["w4"]
    if n_pad != code_size:
        w4 = jnp.pad(w4, ((0, 0), (0, n_pad - code_size)))

    # Pack the four biases into one (4, n_pad) operand (fewer tiny DMAs).
    biases = jnp.zeros((4, n_pad), dtype=jnp.float32)
    biases = biases.at[0, :FC].set(params["b1"].reshape(-1))
    biases = biases.at[1, :FC].set(params["b2"].reshape(-1))
    biases = biases.at[2, :FC].set(params["b3"].reshape(-1))
    biases = biases.at[3, :code_size].set(params["b4"].reshape(-1))

    grid = (b_pad // tm,)
    const = lambda i: (0, 0)   # weights/biases: VMEM-resident, never re-DMA'd

    out = pl.pallas_call(
        functools.partial(position_encoder_kernel, use_bf16=use_bf16),
        out_shape=jax.ShapeDtypeStruct((b_pad, n_pad), jnp.float32),
        grid=grid,
        in_specs=[
            pl.BlockSpec((tm, position_size), lambda i: (i, 0)),   # x tile
            pl.BlockSpec((position_size, FC), const),              # w1
            pl.BlockSpec((FC, FC), const),                         # w2
            pl.BlockSpec((FC, FC), const),                         # w3
            pl.BlockSpec((FC, n_pad), const),                      # w4 (padded)
            pl.BlockSpec((4, n_pad), const),                       # packed biases
        ],
        out_specs=pl.BlockSpec((tm, n_pad), lambda i: (i, 0)),
        compiler_params=pltpu.CompilerParams(
            dimension_semantics=("parallel",),                     # v7x megacore
        ),
    )(x, params["w1"], params["w2"], params["w3"], w4, biases)

    return out[:B, :code_size]


def init_params(key, position_size, code_size):
    """Deterministic N(0,1) weights, zero biases (matches normal_init(m, 0, 1))."""
    ks = jax.random.split(key, 4)
    dims = [(position_size, FC), (FC, FC), (FC, FC), (FC, code_size)]
    params = {}
    for i, ((din, dout), k) in enumerate(zip(dims, ks), start=1):
        # stored as (in, out) == transposed PyTorch nn.Linear weight
        params[f"w{i}"] = jax.random.normal(k, (din, dout), dtype=jnp.float32)
        params[f"b{i}"] = jnp.zeros((1, dout), dtype=jnp.float32)
    return params


def reference_forward(position, params):
    h = position
    for i in range(1, 4):
        h = h @ params[f"w{i}"] + params[f"b{i}"]
        h = jnp.where(h > 0, h, LEAKY_SLOPE * h)
    return h @ params["w4"] + params["b4"]


if __name__ == "__main__":
    position_size = 4
    code_size = 16
    batch = 8

    key = jax.random.PRNGKey(0)
    k_param, k_x, k_x2 = jax.random.split(key, 3)

    params = init_params(k_param, position_size, code_size)
    position = jax.random.normal(k_x, (batch, position_size), dtype=jnp.float32)
    ref = reference_forward(position, params)

    # f32 MXU path (exact vs reference).
    out = position_encoder_forward(position, params, use_bf16=False)
    out = jax.block_until_ready(out)
    assert out.shape == (batch, code_size)
    assert jnp.allclose(out, ref, atol=1e-4, rtol=1e-4), "f32 kernel mismatch"

    # bf16 MXU fast path (v6e/v7x): bf16 dot inputs, f32 accumulate/elementwise.
    out_bf16 = position_encoder_forward(position, params, use_bf16=True)
    out_bf16 = jax.block_until_ready(out_bf16)
    scale = float(jnp.max(jnp.abs(ref))) + 1e-6
    assert float(jnp.max(jnp.abs(out_bf16 - ref))) / scale < 5e-2, "bf16 kernel mismatch"

    # Multi-tile grid with a ragged batch (exercises tail padding + resident weights).
    big_batch = 600
    big_pos = jax.random.normal(k_x2, (big_batch, position_size), dtype=jnp.float32)
    big_out = position_encoder_forward(big_pos, params, block_m=256, use_bf16=False)
    big_out = jax.block_until_ready(big_out)
    big_ref = reference_forward(big_pos, params)
    assert big_out.shape == (big_batch, code_size)
    assert jnp.allclose(big_out, big_ref, atol=1e-3, rtol=1e-4), "tiled kernel mismatch"

    print("KERNEL_OK")
</pallas_src>

<mosaic_0001>
module attributes {stable_mosaic.version = 11 : i64} {
  func.func @position_encoder_kernel(%arg0: i32, %arg1: memref<8x4xf32, #tpu.memory_space<vmem>>, %arg2: memref<4x50xf32, #tpu.memory_space<vmem>>, %arg3: memref<50x50xf32, #tpu.memory_space<vmem>>, %arg4: memref<50x50xf32, #tpu.memory_space<vmem>>, %arg5: memref<50x128xf32, #tpu.memory_space<vmem>>, %arg6: memref<4x128xf32, #tpu.memory_space<vmem>>, %arg7: memref<8x128xf32, #tpu.memory_space<vmem>>) attributes {dimension_semantics = [#tpu.dimension_semantics<parallel>], iteration_bounds = array<i64: 1>, scalar_prefetch = 0 : i64, scratch_operands = 0 : i64, tpu.core_type = #tpu.core_type<tc>, window_params = [{transform_indices = @transform_0, window_bounds = array<i64: 8, 4>}, {pipeline_mode = #tpu.pipeline_mode<synchronous>, transform_indices = @transform_1, window_bounds = array<i64: 4, 50>}, {pipeline_mode = #tpu.pipeline_mode<synchronous>, transform_indices = @transform_2, window_bounds = array<i64: 50, 50>}, {pipeline_mode = #tpu.pipeline_mode<synchronous>, transform_indices = @transform_3, window_bounds = array<i64: 50, 50>}, {pipeline_mode = #tpu.pipeline_mode<synchronous>, transform_indices = @transform_4, window_bounds = array<i64: 50, 128>}, {pipeline_mode = #tpu.pipeline_mode<synchronous>, transform_indices = @transform_5, window_bounds = array<i64: 4, 128>}, {transform_indices = @transform_6, window_bounds = array<i64: 8, 128>}]} {
    %c0 = arith.constant 0 : index
    %c0_0 = arith.constant 0 : index
    %0 = vector.load %arg1[%c0, %c0_0] : memref<8x4xf32, #tpu.memory_space<vmem>>, vector<8x4xf32>
    %c0_1 = arith.constant 0 : index
    %c0_2 = arith.constant 0 : index
    %1 = vector.load %arg2[%c0_1, %c0_2] : memref<4x50xf32, #tpu.memory_space<vmem>>, vector<4x50xf32>
    %cst = arith.constant dense<0.000000e+00> : vector<8x50xf32>
    %2 = tpu.matmul %0, %1, %cst {dimension_numbers = #tpu.dot_dimension_numbers<[1], [0], [0], [1], [0, 0, 1, 1], [], []>} : vector<8x4xf32>, vector<4x50xf32>, vector<8x50xf32> -> vector<8x50xf32>
    %c0_3 = arith.constant 0 : index
    %c0_4 = arith.constant 0 : index
    %3 = vector.load %arg6[%c0_3, %c0_4] : memref<4x128xf32, #tpu.memory_space<vmem>>, vector<1x50xf32>
    %4 = vector.broadcast %3 : vector<1x50xf32> to vector<8x50xf32>
    %5 = arith.addf %2, %4 : vector<8x50xf32>
    %cst_5 = arith.constant 0.000000e+00 : f32
    %6 = vector.broadcast %cst_5 : f32 to vector<8x50xf32>
    %7 = arith.cmpf ogt, %5, %6 : vector<8x50xf32>
    %cst_6 = arith.constant 0.00999999977 : f32
    %8 = vector.broadcast %cst_6 : f32 to vector<8x50xf32>
    %9 = arith.mulf %8, %5 : vector<8x50xf32>
    %10 = arith.select %7, %5, %9 : vector<8x50xi1>, vector<8x50xf32>
    %c0_7 = arith.constant 0 : index
    %c0_8 = arith.constant 0 : index
    %11 = vector.load %arg3[%c0_7, %c0_8] : memref<50x50xf32, #tpu.memory_space<vmem>>, vector<50x50xf32>
    %cst_9 = arith.constant dense<0.000000e+00> : vector<8x50xf32>
    %12 = tpu.matmul %10, %11, %cst_9 {dimension_numbers = #tpu.dot_dimension_numbers<[1], [0], [0], [1], [0, 0, 1, 1], [], []>} : vector<8x50xf32>, vector<50x50xf32>, vector<8x50xf32> -> vector<8x50xf32>
    %c1 = arith.constant 1 : index
    %c0_10 = arith.constant 0 : index
    %13 = vector.load %arg6[%c1, %c0_10] : memref<4x128xf32, #tpu.memory_space<vmem>>, vector<1x50xf32>
    %14 = vector.broadcast %13 : vector<1x50xf32> to vector<8x50xf32>
    %15 = arith.addf %12, %14 : vector<8x50xf32>
    %cst_11 = arith.constant 0.000000e+00 : f32
    %16 = vector.broadcast %cst_11 : f32 to vector<8x50xf32>
    %17 = arith.cmpf ogt, %15, %16 : vector<8x50xf32>
    %cst_12 = arith.constant 0.00999999977 : f32
    %18 = vector.broadcast %cst_12 : f32 to vector<8x50xf32>
    %19 = arith.mulf %18, %15 : vector<8x50xf32>
    %20 = arith.select %17, %15, %19 : vector<8x50xi1>, vector<8x50xf32>
    %c0_13 = arith.constant 0 : index
    %c0_14 = arith.constant 0 : index
    %21 = vector.load %arg4[%c0_13, %c0_14] : memref<50x50xf32, #tpu.memory_space<vmem>>, vector<50x50xf32>
    %cst_15 = arith.constant dense<0.000000e+00> : vector<8x50xf32>
    %22 = tpu.matmul %20, %21, %cst_15 {dimension_numbers = #tpu.dot_dimension_numbers<[1], [0], [0], [1], [0, 0, 1, 1], [], []>} : vector<8x50xf32>, vector<50x50xf32>, vector<8x50xf32> -> vector<8x50xf32>
    %c2 = arith.constant 2 : index
    %c0_16 = arith.constant 0 : index
    %23 = vector.load %arg6[%c2, %c0_16] : memref<4x128xf32, #tpu.memory_space<vmem>>, vector<1x50xf32>
    %24 = vector.broadcast %23 : vector<1x50xf32> to vector<8x50xf32>
    %25 = arith.addf %22, %24 : vector<8x50xf32>
    %cst_17 = arith.constant 0.000000e+00 : f32
    %26 = vector.broadcast %cst_17 : f32 to vector<8x50xf32>
    %27 = arith.cmpf ogt, %25, %26 : vector<8x50xf32>
    %cst_18 = arith.constant 0.00999999977 : f32
    %28 = vector.broadcast %cst_18 : f32 to vector<8x50xf32>
    %29 = arith.mulf %28, %25 : vector<8x50xf32>
    %30 = arith.select %27, %25, %29 : vector<8x50xi1>, vector<8x50xf32>
    %c0_19 = arith.constant 0 : index
    %c0_20 = arith.constant 0 : index
    %31 = vector.load %arg5[%c0_19, %c0_20] : memref<50x128xf32, #tpu.memory_space<vmem>>, vector<50x128xf32>
    %cst_21 = arith.constant dense<0.000000e+00> : vector<8x128xf32>
    %32 = tpu.matmul %30, %31, %cst_21 {dimension_numbers = #tpu.dot_dimension_numbers<[1], [0], [0], [1], [0, 0, 1, 1], [], []>} : vector<8x50xf32>, vector<50x128xf32>, vector<8x128xf32> -> vector<8x128xf32>
    %c3 = arith.constant 3 : index
    %c0_22 = arith.constant 0 : index
    %33 = vector.load %arg6[%c3, %c0_22] : memref<4x128xf32, #tpu.memory_space<vmem>>, vector<1x128xf32>
    %34 = vector.broadcast %33 : vector<1x128xf32> to vector<8x128xf32>
    %35 = arith.addf %32, %34 : vector<8x128xf32>
    %c0_23 = arith.constant 0 : index
    %c0_24 = arith.constant 0 : index
    %36 = vector.load %arg7[%c0_23, %c0_24] : memref<8x128xf32, #tpu.memory_space<vmem>>, vector<8x128xf32>
    tpu.vector_store %arg7[%c0_23, %c0_24], %35 {strides = array<i32>} : memref<8x128xf32, #tpu.memory_space<vmem>>, vector<8x128xf32>,
    return
  }
  func.func @transform_0(%arg0: i32) -> (i32, i32) {
    %c0_i32 = arith.constant 0 : i32
    %c0_i32_0 = arith.constant 0 : i32
    return %arg0, %c0_i32 : i32, i32
  }
  func.func @transform_1(%arg0: i32) -> (i32, i32) {
    %c0_i32 = arith.constant 0 : i32
    %c0_i32_0 = arith.constant 0 : i32
    %c0_i32_1 = arith.constant 0 : i32
    return %c0_i32, %c0_i32_0 : i32, i32
  }
  func.func @transform_2(%arg0: i32) -> (i32, i32) {
    %c0_i32 = arith.constant 0 : i32
    %c0_i32_0 = arith.constant 0 : i32
    %c0_i32_1 = arith.constant 0 : i32
    return %c0_i32, %c0_i32_0 : i32, i32
  }
  func.func @transform_3(%arg0: i32) -> (i32, i32) {
    %c0_i32 = arith.constant 0 : i32
    %c0_i32_0 = arith.constant 0 : i32
    %c0_i32_1 = arith.constant 0 : i32
    return %c0_i32, %c0_i32_0 : i32, i32
  }
  func.func @transform_4(%arg0: i32) -> (i32, i32) {
    %c0_i32 = arith.constant 0 : i32
    %c0_i32_0 = arith.constant 0 : i32
    %c0_i32_1 = arith.constant 0 : i32
    return %c0_i32, %c0_i32_0 : i32, i32
  }
  func.func @transform_5(%arg0: i32) -> (i32, i32) {
    %c0_i32 = arith.constant 0 : i32
    %c0_i32_0 = arith.constant 0 : i32
    %c0_i32_1 = arith.constant 0 : i32
    return %c0_i32, %c0_i32_0 : i32, i32
  }
  func.func @transform_6(%arg0: i32) -> (i32, i32) {
    %c0_i32 = arith.constant 0 : i32
    %c0_i32_0 = arith.constant 0 : i32
    return %arg0, %c0_i32 : i32, i32
  }
}

</mosaic_0001>

<llo_original>
// kernel: tpu_custom_call.1
$region0: #{tpu_custom_call.1}
  #allocation0 [shape = 'u32[]', space=smem, size = 0x4, offset = 0x4, fixed_abs, tag = 'smem constant byte address 0x4 - core index']
  #allocation1 [shape = 'u32[144,128]{1,0:T(1,128)}', space=vmem, size = 0x12000, scoped, tag = 'internal scratch']
  %s0 = inlined_call_operand.vmem [shape: f32[8,4], index: 0, kind: input, shape index: {}]
  %s1 = inlined_call_operand.vmem [shape: f32[4,50], index: 1, kind: input, shape index: {}]
  %s2 = inlined_call_operand.hbm [shape: f32[50,50], index: 2, kind: input, shape index: {}]
  %s3 = inlined_call_operand.hbm [shape: f32[50,50], index: 3, kind: input, shape index: {}]
  %s4 = inlined_call_operand.hbm [shape: f32[50,128], index: 4, kind: input, shape index: {}]
  %s5 = inlined_call_operand.vmem [shape: f32[4,128], index: 5, kind: input, shape index: {}]
  %s6 = inlined_call_operand.hbm [shape: f32[8,128], index: 6, kind: output, shape index: {}]
  %s7 = sld [smem:[#allocation0]]
  $region46: #{tpu_custom_call.1} parent=0
    _
  %s9 = ssub.s32 1, %s7
  %s10 = scalar_select 0, %s9, %s7
  $region1: #{tpu_custom_call.1} parent=0
    #allocation2 [shape = 'u8[28672]{0}', space=vmem, size = 0x7000, scoped, tag = 'input window, operand 2, single buffered']
    #allocation3 [shape = 's32[1]{0}', space=sflag, size = 0x4, scoped, tag = 'scoped memory for tpu_custom_call.1']
    #allocation4 [shape = 's32[1]{0}', space=sflag, size = 0x4, scoped, tag = 'scoped memory for tpu_custom_call.1']
    #allocation5 [shape = 'u8[28672]{0}', space=vmem, size = 0x7000, scoped, tag = 'input window, operand 3, single buffered']
    #allocation6 [shape = 's32[1]{0}', space=sflag, size = 0x4, scoped, tag = 'scoped memory for tpu_custom_call.1']
    #allocation7 [shape = 'u8[28672]{0}', space=vmem, size = 0x7000, scoped, tag = 'input window, operand 4, single buffered']
    #allocation8 [shape = 'u8[4096]{0}', space=vmem, size = 0x1000, scoped, tag = 'output window, operand 0, single buffered']
    %11 = vsyncpa [#allocation3], 0
    %12 = vsyncpa [#allocation6], 0
    %13 = vsyncpa [#allocation4], 0
    // Predicated region
    $region2: #{tpu_custom_call.1} parent=1 // pred_check
      _
    $region3: #{tpu_custom_call.1} parent=1 // pred_check_branch
      %15 = sbr.rel (0) target = $region5
    $region4: #{tpu_custom_call.1} parent=1 // pred_region
      _
    $region5: #{tpu_custom_call.1} parent=1 // pred_fallthru
      _
    // Predicated region
    $region6: #{tpu_custom_call.1} parent=1 // pred_check
      _
    $region7: #{tpu_custom_call.1} parent=1 // pred_check_branch
      %17 = sbr.rel (0) target = $region9
    $region8: #{tpu_custom_call.1} parent=1 // pred_region
      _
    $region9: #{tpu_custom_call.1} parent=1 // pred_fallthru
      _
    // Predicated region
    $region10: #{tpu_custom_call.1} parent=1 // pred_check
      _
    $region11: #{tpu_custom_call.1} parent=1 // pred_check_branch
      %19 = sbr.rel (0) target = $region13
    $region12: #{tpu_custom_call.1} parent=1 // pred_region
      %s21 = ssub.s32 896, 896
      %22 = vsyncadd [#allocation3], %s21
      %s23 = sshll.u32 [#allocation2], 4
      %s24 = int_to_ptr.vmem [resolvable:$true] %s23
      %29 = dma.hbm_to_vmem [thread:$0]  %s2, 896, %s24, [#allocation3], 128, 128, 8
    $region13: #{tpu_custom_call.1} parent=1 // pred_fallthru
      _
    // Predicated region
    $region14: #{tpu_custom_call.1} parent=1 // pred_check
      _
    $region15: #{tpu_custom_call.1} parent=1 // pred_check_branch
      %31 = sbr.rel (0) target = $region17
    $region16: #{tpu_custom_call.1} parent=1 // pred_region
      %s33 = ssub.s32 896, 896
      %34 = vsyncadd [#allocation6], %s33
      %s35 = sshll.u32 [#allocation5], 4
      %s36 = int_to_ptr.vmem [resolvable:$true] %s35
      %41 = dma.hbm_to_vmem [thread:$0]  %s3, 896, %s36, [#allocation6], 128, 128, 8
    $region17: #{tpu_custom_call.1} parent=1 // pred_fallthru
      _
    // Predicated region
    $region18: #{tpu_custom_call.1} parent=1 // pred_check
      _
    $region19: #{tpu_custom_call.1} parent=1 // pred_check_branch
      %43 = sbr.rel (0) target = $region21
    $region20: #{tpu_custom_call.1} parent=1 // pred_region
      %s45 = ssub.s32 896, 896
      %46 = vsyncadd [#allocation6], %s45
      %s47 = sshll.u32 [#allocation7], 4
      %s48 = int_to_ptr.vmem [resolvable:$true] %s47
      %53 = dma.hbm_to_vmem [thread:$0]  %s4, 896, %s48, [#allocation6], 128, 128, 8
    $region21: #{tpu_custom_call.1} parent=1 // pred_fallthru
      _
    // Predicated region
    $region22: #{tpu_custom_call.1} parent=1 // pred_check
      _
    $region23: #{tpu_custom_call.1} parent=1 // pred_check_branch
      %55 = sbr.rel (0) target = $region25
    $region24: #{tpu_custom_call.1} parent=1 // pred_region
      _
    $region25: #{tpu_custom_call.1} parent=1 // pred_fallthru
      _
    // Predicated region
    $region26: #{tpu_custom_call.1} parent=1 // pred_check
      _
    $region27: #{tpu_custom_call.1} parent=1 // pred_check_branch
      %57 = sbr.rel (0) target = $region29
    $region28: #{tpu_custom_call.1} parent=1 // pred_region
      %58 = dma.done [#allocation3], 896
    $region29: #{tpu_custom_call.1} parent=1 // pred_fallthru
      _
    // Predicated region
    $region30: #{tpu_custom_call.1} parent=1 // pred_check
      _
    $region31: #{tpu_custom_call.1} parent=1 // pred_check_branch
      %60 = sbr.rel (0) target = $region33
    $region32: #{tpu_custom_call.1} parent=1 // pred_region
      %61 = dma.done [#allocation6], 896
    $region33: #{tpu_custom_call.1} parent=1 // pred_fallthru
      _
    // Predicated region
    $region34: #{tpu_custom_call.1} parent=1 // pred_check
      _
    $region35: #{tpu_custom_call.1} parent=1 // pred_check_branch
      %63 = sbr.rel (0) target = $region37
    $region36: #{tpu_custom_call.1} parent=1 // pred_region
      %64 = dma.done [#allocation6], 896
    $region37: #{tpu_custom_call.1} parent=1 // pred_fallthru
      _
    %v65 = vld [vmem:[%s0] sm:$0xff]
    %v66 = vld [vmem:[%s1] sm:$0xf]
    %v67 = vld [vmem:[%s5] sm:$0x1]
    %v68 = vlaneseq
    %v69 = vshrl.u32 %v68, 7
    %v70 = vsub.s32 0, %v69
    %v71 = vrot.slane %v67, %v70
    %vm72 = vcmask 31744
    %v74 = vsel %vm72, %v65, 0
    %vm76 = vcmask 1043456
    %v78 = vsel %vm76, %v66, 0
    %80 = vmatprep.subr.mxu0 0.0
    %81 = vmatpush1.msra.mxu0 %v78
    %82 = vmatprep.subr.mxu0 0.0
    %83 = vmatpush1.msra.mxu0 0.0
    %84 = vmatprep.subr.mxu0 0.0
    %85 = vmatpush1.msra.mxu0 0.0
    %86 = vmatprep.subr.mxu0 0.0
    %87 = vmatpush1.msra.mxu0 0.0
    %88 = vmatprep.subr.mxu0 0.0
    %89 = vmatpush1.msra.mxu0 0.0
    %90 = vmatprep.subr.mxu0 0.0
    %91 = vmatpush1.msra.mxu0 0.0
    %92 = vmatprep.subr.mxu0 0.0
    %93 = vmatpush1.msra.mxu0 0.0
    %94 = vmatprep.subr.mxu0 0.0
    %95 = vmatpush1.msra.mxu0 0.0
    %96 = vmatprep.subr.mxu0 0.0
    %97 = vmatpush1.msra.mxu0 0.0
    %98 = vmatprep.subr.mxu0 0.0
    %99 = vmatpush1.msra.mxu0 0.0
    %100 = vmatprep.subr.mxu0 0.0
    %101 = vmatpush1.msra.mxu0 0.0
    %102 = vmatprep.subr.mxu0 0.0
    %103 = vmatpush1.msra.mxu0 0.0
    %104 = vmatprep.subr.mxu0 0.0
    %105 = vmatpush1.msra.mxu0 0.0
    %106 = vmatprep.subr.mxu0 0.0
    %107 = vmatpush1.msra.mxu0 0.0
    %108 = vmatprep.subr.mxu0 0.0
    %109 = vmatpush1.msra.mxu0 0.0
    %110 = vmatprep.subr.mxu0 0.0
    %111 = vmatpush1.msra.mxu0 0.0
    %112 = vmatprep.subr.mxu0 0.0
    %113 = vmatpush1.msra.mxu0 0.0
    %114 = vmatprep.subr.mxu0 0.0
    %115 = vmatpush1.msra.mxu0 0.0
    %116 = vmatprep.subr.mxu0 0.0
    %117 = vmatpush1.msra.mxu0 0.0
    %118 = vmatprep.subr.mxu0 0.0
    %119 = vmatpush1.msra.mxu0 0.0
    %120 = vmatprep.subr.mxu0 0.0
    %121 = vmatpush1.msra.mxu0 0.0
    %122 = vmatprep.subr.mxu0 0.0
    %123 = vmatpush1.msra.mxu0 0.0
    %124 = vmatprep.subr.mxu0 0.0
    %125 = vmatpush1.msra.mxu0 0.0
    %126 = vmatprep.subr.mxu0 0.0
    %127 = vmatpush1.msra.mxu0 0.0
    %128 = vmatprep.subr.mxu0 0.0
    %129 = vmatpush1.msra.mxu0 0.0
    %130 = vmatprep.subr.mxu0 0.0
    %131 = vmatpush1.msra.mxu0 0.0
    %132 = vmatprep.subr.mxu0 0.0
    %133 = vmatpush1.msra.mxu0 0.0
    %134 = vmatprep.subr.mxu0 0.0
    %135 = vmatpush1.msra.mxu0 0.0
    %136 = vmatprep.subr.mxu0 0.0
    %137 = vmatpush1.msra.mxu0 0.0
    %138 = vmatprep.subr.mxu0 0.0
    %139 = vmatpush1.msra.mxu0 0.0
    %140 = vmatprep.subr.mxu0 0.0
    %141 = vmatpush1.msra.mxu0 0.0
    %142 = vmatprep.subr.mxu0 0.0
    %143 = vmatpush1.msra.mxu0 0.0
    %144 = vmatprep.mubr.f32.mxu0 0.0
    %145 = vmatmul.mubr.f32.gmra.mrb[0].mxu0 %v74
    %v146 = vpop.f32.mrb[0].mxu0
    %v147 = vadd.f32 %v71, %v146
    %v148 = vpop.f32.mrb[0].mxu0
    %149 = vdwg.mxu0
    %vm150 = vcmp.gt.f32.partialorder %v147, 0.0
    %v151 = vmul.f32 %v147, 0.01
    %v152 = vsel %vm150, %v147, %v151
    %v153 = vld [vmem:[#allocation2] sm:$0xff]
    %v154 = vld [vmem:[#allocation2 + $0x8] sm:$0xff]
    %v155 = vld [vmem:[#allocation2 + $0x10] sm:$0xff]
    %v156 = vld [vmem:[#allocation2 + $0x18] sm:$0xff]
    %v157 = vld [vmem:[#allocation2 + $0x20] sm:$0xff]
    %v158 = vld [vmem:[#allocation2 + $0x28] sm:$0xff]
    %v159 = vld [vmem:[#allocation2 + $0x30] sm:$0x3]
    %v160 = vld [vmem:[%s5 + $0x1] sm:$0x1]
    %v161 = vlaneseq
    %v162 = vshrl.u32 %v161, 7
    %v163 = vsub.s32 0, %v162
    %v164 = vrot.slane %v160, %v163
    %vm165 = vcmask 408576
    %v167 = vsel %vm165, %v152, 0
    %vm169 = vcmask 1041408
    %v171 = vsel %vm169, %v159, 0
    %173 = vmatprep.subr.mxu0 0.0
    %174 = vmatpush1.msra.mxu0 %v153
    %175 = vmatprep.subr.mxu0 0.0
    %176 = vmatpush1.msra.mxu0 %v154
    %177 = vmatprep.subr.mxu0 0.0
    %178 = vmatpush1.msra.mxu0 %v155
    %179 = vmatprep.subr.mxu0 0.0
    %180 = vmatpush1.msra.mxu0 %v156
    %181 = vmatprep.subr.mxu0 0.0
    %182 = vmatpush1.msra.mxu0 %v157
    %183 = vmatprep.subr.mxu0 0.0
    %184 = vmatpush1.msra.mxu0 %v158
    %185 = vmatprep.subr.mxu0 0.0
    %186 = vmatpush1.msra.mxu0 %v171
    %187 = vmatprep.subr.mxu0 0.0
    %188 = vmatpush1.msra.mxu0 0.0
    %189 = vmatprep.subr.mxu0 0.0
    %190 = vmatpush1.msra.mxu0 0.0
    %191 = vmatprep.subr.mxu0 0.0
    %192 = vmatpush1.msra.mxu0 0.0
    %193 = vmatprep.subr.mxu0 0.0
    %194 = vmatpush1.msra.mxu0 0.0
    %195 = vmatprep.subr.mxu0 0.0
    %196 = vmatpush1.msra.mxu0 0.0
    %197 = vmatprep.subr.mxu0 0.0
    %198 = vmatpush1.msra.mxu0 0.0
    %199 = vmatprep.subr.mxu0 0.0
    %200 = vmatpush1.msra.mxu0 0.0
    %201 = vmatprep.subr.mxu0 0.0
    %202 = vmatpush1.msra.mxu0 0.0
    %203 = vmatprep.subr.mxu0 0.0
    %204 = vmatpush1.msra.mxu0 0.0
    %205 = vmatprep.subr.mxu0 0.0
    %206 = vmatpush1.msra.mxu0 0.0
    %207 = vmatprep.subr.mxu0 0.0
    %208 = vmatpush1.msra.mxu0 0.0
    %209 = vmatprep.subr.mxu0 0.0
    %210 = vmatpush1.msra.mxu0 0.0
    %211 = vmatprep.subr.mxu0 0.0
    %212 = vmatpush1.msra.mxu0 0.0
    %213 = vmatprep.subr.mxu0 0.0
    %214 = vmatpush1.msra.mxu0 0.0
    %215 = vmatprep.subr.mxu0 0.0
    %216 = vmatpush1.msra.mxu0 0.0
    %217 = vmatprep.subr.mxu0 0.0
    %218 = vmatpush1.msra.mxu0 0.0
    %219 = vmatprep.subr.mxu0 0.0
    %220 = vmatpush1.msra.mxu0 0.0
    %221 = vmatprep.subr.mxu0 0.0
    %222 = vmatpush1.msra.mxu0 0.0
    %223 = vmatprep.subr.mxu0 0.0
    %224 = vmatpush1.msra.mxu0 0.0
    %225 = vmatprep.subr.mxu0 0.0
    %226 = vmatpush1.msra.mxu0 0.0
    %227 = vmatprep.subr.mxu0 0.0
    %228 = vmatpush1.msra.mxu0 0.0
    %229 = vmatprep.subr.mxu0 0.0
    %230 = vmatpush1.msra.mxu0 0.0
    %231 = vmatprep.subr.mxu0 0.0
    %232 = vmatpush1.msra.mxu0 0.0
    %233 = vmatprep.subr.mxu0 0.0
    %234 = vmatpush1.msra.mxu0 0.0
    %235 = vmatprep.subr.mxu0 0.0
    %236 = vmatpush1.msra.mxu0 0.0
    %237 = vmatprep.mubr.f32.mxu0 0.0
    %238 = vmatmul.mubr.f32.gmra.mrb[0].mxu0 %v167
    %v239 = vpop.f32.mrb[0].mxu0
    %v240 = vadd.f32 %v164, %v239
    %v241 = vpop.f32.mrb[0].mxu0
    %242 = vdwg.mxu0
    %vm243 = vcmp.gt.f32.partialorder %v240, 0.0
    %v244 = vmul.f32 %v240, 0.01
    %v245 = vsel %vm243, %v240, %v244
    %v246 = vld [vmem:[#allocation5] sm:$0xff]
    %v247 = vld [vmem:[#allocation5 + $0x8] sm:$0xff]
    %v248 = vld [vmem:[#allocation5 + $0x10] sm:$0xff]
    %v249 = vld [vmem:[#allocation5 + $0x18] sm:$0xff]
    %v250 = vld [vmem:[#allocation5 + $0x20] sm:$0xff]
    %v251 = vld [vmem:[#allocation5 + $0x28] sm:$0xff]
    %v252 = vld [vmem:[#allocation5 + $0x30] sm:$0x3]
    %v253 = vld [vmem:[%s5 + $0x2] sm:$0x1]
    %v254 = vlaneseq
    %v255 = vshrl.u32 %v254, 7
    %v256 = vsub.s32 0, %v255
    %v257 = vrot.slane %v253, %v256
    %v259 = vsel %vm165, %v245, 0
    %v262 = vsel %vm169, %v252, 0
    %264 = vmatprep.subr.mxu0 0.0
    %265 = vmatpush1.msra.mxu0 %v246
    %266 = vmatprep.subr.mxu0 0.0
    %267 = vmatpush1.msra.mxu0 %v247
    %268 = vmatprep.subr.mxu0 0.0
    %269 = vmatpush1.msra.mxu0 %v248
    %270 = vmatprep.subr.mxu0 0.0
    %271 = vmatpush1.msra.mxu0 %v249
    %272 = vmatprep.subr.mxu0 0.0
    %273 = vmatpush1.msra.mxu0 %v250
    %274 = vmatprep.subr.mxu0 0.0
    %275 = vmatpush1.msra.mxu0 %v251
    %276 = vmatprep.subr.mxu0 0.0
    %277 = vmatpush1.msra.mxu0 %v262
    %278 = vmatprep.subr.mxu0 0.0
    %279 = vmatpush1.msra.mxu0 0.0
    %280 = vmatprep.subr.mxu0 0.0
    %281 = vmatpush1.msra.mxu0 0.0
    %282 = vmatprep.subr.mxu0 0.0
    %283 = vmatpush1.msra.mxu0 0.0
    %284 = vmatprep.subr.mxu0 0.0
    %285 = vmatpush1.msra.mxu0 0.0
    %286 = vmatprep.subr.mxu0 0.0
    %287 = vmatpush1.msra.mxu0 0.0
    %288 = vmatprep.subr.mxu0 0.0
    %289 = vmatpush1.msra.mxu0 0.0
    %290 = vmatprep.subr.mxu0 0.0
    %291 = vmatpush1.msra.mxu0 0.0
    %292 = vmatprep.subr.mxu0 0.0
    %293 = vmatpush1.msra.mxu0 0.0
    %294 = vmatprep.subr.mxu0 0.0
    %295 = vmatpush1.msra.mxu0 0.0
    %296 = vmatprep.subr.mxu0 0.0
    %297 = vmatpush1.msra.mxu0 0.0
    %298 = vmatprep.subr.mxu0 0.0
    %299 = vmatpush1.msra.mxu0 0.0
    %300 = vmatprep.subr.mxu0 0.0
    %301 = vmatpush1.msra.mxu0 0.0
    %302 = vmatprep.subr.mxu0 0.0
    %303 = vmatpush1.msra.mxu0 0.0
    %304 = vmatprep.subr.mxu0 0.0
    %305 = vmatpush1.msra.mxu0 0.0
    %306 = vmatprep.subr.mxu0 0.0
    %307 = vmatpush1.msra.mxu0 0.0
    %308 = vmatprep.subr.mxu0 0.0
    %309 = vmatpush1.msra.mxu0 0.0
    %310 = vmatprep.subr.mxu0 0.0
    %311 = vmatpush1.msra.mxu0 0.0
    %312 = vmatprep.subr.mxu0 0.0
    %313 = vmatpush1.msra.mxu0 0.0
    %314 = vmatprep.subr.mxu0 0.0
    %315 = vmatpush1.msra.mxu0 0.0
    %316 = vmatprep.subr.mxu0 0.0
    %317 = vmatpush1.msra.mxu0 0.0
    %318 = vmatprep.subr.mxu0 0.0
    %319 = vmatpush1.msra.mxu0 0.0
    %320 = vmatprep.subr.mxu0 0.0
    %321 = vmatpush1.msra.mxu0 0.0
    %322 = vmatprep.subr.mxu0 0.0
    %323 = vmatpush1.msra.mxu0 0.0
    %324 = vmatprep.subr.mxu0 0.0
    %325 = vmatpush1.msra.mxu0 0.0
    %326 = vmatprep.subr.mxu0 0.0
    %327 = vmatpush1.msra.mxu0 0.0
    %328 = vmatprep.mubr.f32.mxu0 0.0
    %329 = vmatmul.mubr.f32.gmra.mrb[0].mxu0 %v259
    %v330 = vpop.f32.mrb[0].mxu0
    %v331 = vadd.f32 %v257, %v330
    %v332 = vpop.f32.mrb[0].mxu0
    %333 = vdwg.mxu0
    %vm334 = vcmp.gt.f32.partialorder %v331, 0.0
    %v335 = vmul.f32 %v331, 0.01
    %v336 = vsel %vm334, %v331, %v335
    %v337 = vld [vmem:[#allocation7] sm:$0xff]
    %v338 = vld [vmem:[#allocation7 + $0x8] sm:$0xff]
    %v339 = vld [vmem:[#allocation7 + $0x10] sm:$0xff]
    %v340 = vld [vmem:[#allocation7 + $0x18] sm:$0xff]
    %v341 = vld [vmem:[#allocation7 + $0x20] sm:$0xff]
    %v342 = vld [vmem:[#allocation7 + $0x28] sm:$0xff]
    %v343 = vld [vmem:[#allocation7 + $0x30] sm:$0x3]
    %v344 = vld [vmem:[%s5 + $0x3] sm:$0x1]
    %v345 = vlaneseq
    %v346 = vshrl.u32 %v345, 7
    %v347 = vsub.s32 0, %v346
    %v348 = vrot.slane %v344, %v347
    %v350 = vsel %vm165, %v336, 0
    %v353 = vsel %vm169, %v343, 0
    %355 = vmatprep.subr.mxu0 0.0
    %356 = vmatpush1.msra.mxu0 %v337
    %357 = vmatprep.subr.mxu0 0.0
    %358 = vmatpush1.msra.mxu0 %v338
    %359 = vmatprep.subr.mxu0 0.0
    %360 = vmatpush1.msra.mxu0 %v339
    %361 = vmatprep.subr.mxu0 0.0
    %362 = vmatpush1.msra.mxu0 %v340
    %363 = vmatprep.subr.mxu0 0.0
    %364 = vmatpush1.msra.mxu0 %v341
    %365 = vmatprep.subr.mxu0 0.0
    %366 = vmatpush1.msra.mxu0 %v342
    %367 = vmatprep.subr.mxu0 0.0
    %368 = vmatpush1.msra.mxu0 %v353
    %369 = vmatprep.subr.mxu0 0.0
    %370 = vmatpush1.msra.mxu0 0.0
    %371 = vmatprep.subr.mxu0 0.0
    %372 = vmatpush1.msra.mxu0 0.0
    %373 = vmatprep.subr.mxu0 0.0
    %374 = vmatpush1.msra.mxu0 0.0
    %375 = vmatprep.subr.mxu0 0.0
    %376 = vmatpush1.msra.mxu0 0.0
    %377 = vmatprep.subr.mxu0 0.0
    %378 = vmatpush1.msra.mxu0 0.0
    %379 = vmatprep.subr.mxu0 0.0
    %380 = vmatpush1.msra.mxu0 0.0
    %381 = vmatprep.subr.mxu0 0.0
    %382 = vmatpush1.msra.mxu0 0.0
    %383 = vmatprep.subr.mxu0 0.0
    %384 = vmatpush1.msra.mxu0 0.0
    %385 = vmatprep.subr.mxu0 0.0
    %386 = vmatpush1.msra.mxu0 0.0
    %387 = vmatprep.subr.mxu0 0.0
    %388 = vmatpush1.msra.mxu0 0.0
    %389 = vmatprep.subr.mxu0 0.0
    %390 = vmatpush1.msra.mxu0 0.0
    %391 = vmatprep.subr.mxu0 0.0
    %392 = vmatpush1.msra.mxu0 0.0
    %393 = vmatprep.subr.mxu0 0.0
    %394 = vmatpush1.msra.mxu0 0.0
    %395 = vmatprep.subr.mxu0 0.0
    %396 = vmatpush1.msra.mxu0 0.0
    %397 = vmatprep.subr.mxu0 0.0
    %398 = vmatpush1.msra.mxu0 0.0
    %399 = vmatprep.subr.mxu0 0.0
    %400 = vmatpush1.msra.mxu0 0.0
    %401 = vmatprep.subr.mxu0 0.0
    %402 = vmatpush1.msra.mxu0 0.0
    %403 = vmatprep.subr.mxu0 0.0
    %404 = vmatpush1.msra.mxu0 0.0
    %405 = vmatprep.subr.mxu0 0.0
    %406 = vmatpush1.msra.mxu0 0.0
    %407 = vmatprep.subr.mxu0 0.0
    %408 = vmatpush1.msra.mxu0 0.0
    %409 = vmatprep.subr.mxu0 0.0
    %410 = vmatpush1.msra.mxu0 0.0
    %411 = vmatprep.subr.mxu0 0.0
    %412 = vmatpush1.msra.mxu0 0.0
    %413 = vmatprep.subr.mxu0 0.0
    %414 = vmatpush1.msra.mxu0 0.0
    %415 = vmatprep.subr.mxu0 0.0
    %416 = vmatpush1.msra.mxu0 0.0
    %417 = vmatprep.subr.mxu0 0.0
    %418 = vmatpush1.msra.mxu0 0.0
    %419 = vmatprep.mubr.f32.mxu0 0.0
    %420 = vmatmul.mubr.f32.gmra.mrb[0].mxu0 %v350
    %v421 = vpop.f32.mrb[0].mxu0
    %v422 = vadd.f32 %v348, %v421
    %v423 = vpop.f32.mrb[0].mxu0
    %424 = vdwg.mxu0
    %425 = vst [vmem:[#allocation8] sm:$0xff] %v422
    // Predicated region
    $region38: #{tpu_custom_call.1} parent=1 // pred_check
      _
    $region39: #{tpu_custom_call.1} parent=1 // pred_check_branch
      %427 = sbr.rel (0) target = $region41
    $region40: #{tpu_custom_call.1} parent=1 // pred_region
      %s429 = ssub.s32 128, 128
      %430 = vsyncadd [#allocation4], %s429
      %s432 = sshll.u32 [#allocation8], 4
      %s433 = int_to_ptr.vmem [resolvable:$true] %s432
      %435 = dma.vmem_to_hbm [thread:$0]  %s433, 128, %s6, [#allocation4]
    $region41: #{tpu_custom_call.1} parent=1 // pred_fallthru
      _
    // Predicated region
    $region42: #{tpu_custom_call.1} parent=1 // pred_check
      _
    $region43: #{tpu_custom_call.1} parent=1 // pred_check_branch
      %437 = sbr.rel (0) target = $region45
    $region44: #{tpu_custom_call.1} parent=1 // pred_region
      %438 = dma.done [#allocation4], 128
    $region45: #{tpu_custom_call.1} parent=1 // pred_fallthru
      _
    %439 = vsyncpa [#allocation3], 1
    %440 = vsyncpa [#allocation6], 1
    %441 = vsyncpa [#allocation4], 1

</llo_original>
